<compile_context>
chip_gen: v7x
topology: tpu7x:2x2x1
jax: 0.10.0
libtpu: 0.0.40
codegen_flags: <defaults>
</compile_context>

<pallas_src>
import math

import jax
import jax.numpy as jnp
from jax.experimental import pallas as pl
from jax.experimental.pallas import tpu as pltpu

_LANE = 128


def _affine_kernel(alpha_ref, beta_ref, x_ref, o_ref):
    # Single fused multiply-add on the VPU; (1, L) alpha/beta broadcast over rows.
    o_ref[...] = (alpha_ref[...] * x_ref[...] + beta_ref[...]).astype(o_ref.dtype)


def _vmem_capacity_bytes() -> int:
    """Generation-aware VMEM capacity (v5e/v6e: 128 MiB, v7x: 64 MiB per TC)."""
    try:
        cap = int(pltpu.get_tpu_info().vmem_capacity_bytes)
        if cap > 0:
            return cap
    except Exception:
        pass
    return 64 * 1024 * 1024  # conservative default (v7x per-TensorCore)


def _sublane(dtype) -> int:
    # Sublane packing: 8 rows for 4-byte, 16 for 2-byte, 32 for 1-byte dtypes.
    return max(8, 32 // jnp.dtype(dtype).itemsize)


def _affine_lane_dense(x2d, alpha_row, beta_row, out_dtype, max_tile_bytes,
                       donate_input):
    """pallas_call over a (M_rows, L) view; L is a multiple of 128 (or == dim)."""
    M_rows, L = x2d.shape
    isz_x = jnp.dtype(x2d.dtype).itemsize
    isz_o = jnp.dtype(out_dtype).itemsize
    sub = max(_sublane(x2d.dtype), _sublane(out_dtype))

    # ---- generation-aware VMEM budget ----
    vmem_cap = _vmem_capacity_bytes()
    vmem_limit = min(vmem_cap * 3 // 4, 96 * 1024 * 1024)  # ~48 MiB v7x, ~96 MiB v5e/v6e
    tile_budget = int(vmem_limit * 0.85)                    # headroom for params/scratch

    # Per grid step the pipeline keeps 2 (double-buffered) copies of the x tile
    # and of the out tile live; size rows against that (out dtype may be wider).
    bytes_per_row = 2 * L * (isz_x + isz_o)
    rows_budget = max(sub, tile_budget // max(1, bytes_per_row))
    if max_tile_bytes is not None:
        rows_budget = max(sub, min(rows_budget, max_tile_bytes // max(1, L * isz_x)))
    rows_budget = max(sub, (rows_budget // sub) * sub)

    if M_rows <= rows_budget:
        if M_rows >= 2 * sub:
            # Keep >= 2 grid steps so the "parallel" axis can shard across
            # v7x's two TensorCores (one extra ~0.35 us step elsewhere is noise).
            half = pl.cdiv(M_rows, 2)
            tm = ((half + sub - 1) // sub) * sub
        else:
            tm = M_rows  # single full-extent block (always legal)
    else:
        tm = rows_budget
    grid_m = pl.cdiv(M_rows, tm)

    n = M_rows * L
    cost = pl.CostEstimate(
        flops=2 * n,
        transcendentals=0,
        bytes_accessed=n * isz_x + n * isz_o + 2 * L * isz_o,
    )

    io_alias = {}
    if donate_input and jnp.dtype(x2d.dtype) == jnp.dtype(out_dtype):
        io_alias = {2: 0}

    return pl.pallas_call(
        _affine_kernel,
        out_shape=jax.ShapeDtypeStruct((M_rows, L), out_dtype),
        grid_spec=pl.GridSpec(
            grid=(grid_m,),
            in_specs=[
                pl.BlockSpec((1, L), lambda i: (0, 0)),    # alpha (VMEM-resident)
                pl.BlockSpec((1, L), lambda i: (0, 0)),    # beta  (VMEM-resident)
                pl.BlockSpec((tm, L), lambda i: (i, 0)),   # x row tile
            ],
            out_specs=pl.BlockSpec((tm, L), lambda i: (i, 0)),
        ),
        compiler_params=pltpu.CompilerParams(
            dimension_semantics=("parallel",),
            vmem_limit_bytes=int(vmem_limit),
        ),
        cost_estimate=cost,
        input_output_aliases=io_alias,
    )(alpha_row, beta_row, x2d)


def affine(x, alpha, beta, *, max_tile_bytes=None, donate_input=False,
           promote_dtype=True):
    """y = alpha * x + beta; alpha/beta shape (dim,), broadcast over last axis.

    promote_dtype=True matches PyTorch type promotion (bf16 x + f32 params -> f32 out).
    promote_dtype=False keeps out dtype == x dtype (saves writeback bandwidth).
    """
    orig_shape = x.shape
    dim = orig_shape[-1]
    assert alpha.shape == (dim,) and beta.shape == (dim,)

    if promote_dtype:
        out_dtype = jnp.result_type(x.dtype, alpha.dtype, beta.dtype)
    else:
        out_dtype = x.dtype

    x2d = x.reshape(-1, dim)
    M = x2d.shape[0]

    isz_x = jnp.dtype(x.dtype).itemsize
    isz_o = jnp.dtype(out_dtype).itemsize
    sub = max(_sublane(x.dtype), _sublane(out_dtype))

    # ---- lane-dense repack: fold k rows so lane width L = lcm(dim, 128) ----
    k = _LANE // math.gcd(dim, _LANE)
    L = dim * k
    # Don't fold if even a minimal (sub, L) double-buffered tile pair would
    # blow the VMEM budget (pathologically large, misaligned dim).
    vmem_guard = min(_vmem_capacity_bytes() * 3 // 4, 96 * 1024 * 1024)
    if k > 1 and 2 * sub * L * (isz_x + isz_o) > int(vmem_guard * 0.85):
        k, L = 1, dim

    M_bulk = (M // k) * k if k > 1 else M
    if M_bulk == 0:          # fewer rows than the fold factor: no fold possible
        k, L, M_bulk = 1, dim, M
    tail = M - M_bulk        # 0 <= tail < k

    alpha_row = jnp.tile(alpha.astype(out_dtype), k).reshape(1, L)
    beta_row = jnp.tile(beta.astype(out_dtype), k).reshape(1, L)

    if tail == 0:
        x_bulk = x2d.reshape(M // k, L)        # pure metadata reshape
        out_bulk = _affine_lane_dense(x_bulk, alpha_row, beta_row, out_dtype,
                                      max_tile_bytes, donate_input)
        return out_bulk.reshape(orig_shape)

    # Rare remainder path (< k leftover rows): keep the bulk (>99% of traffic)
    # on the full-width 128-lane kernel, handle the tail with plain jnp, then
    # stitch. (The common, aligned case above never pays this concat.)
    x_bulk = x2d[:M_bulk].reshape(M_bulk // k, L)
    out_bulk = _affine_lane_dense(x_bulk, alpha_row, beta_row, out_dtype,
                                  max_tile_bytes, False)
    x_tail = x2d[M_bulk:]
    out_tail = (alpha.astype(out_dtype) * x_tail.astype(out_dtype)
                + beta.astype(out_dtype)).astype(out_dtype)
    out = jnp.concatenate([out_bulk.reshape(M_bulk, dim), out_tail], axis=0)
    return out.reshape(orig_shape)


if __name__ == "__main__":
    key = jax.random.PRNGKey(0)
    ka, kb, kx1, kx2, kx3 = jax.random.split(key, 5)

    # Module config: Affine(dim) with hidden size dim = 32.
    dim = 32
    alpha = jnp.ones((dim,), jnp.float32) + 0.1 * jax.random.normal(ka, (dim,), jnp.float32)
    beta = jnp.zeros((dim,), jnp.float32) + 0.1 * jax.random.normal(kb, (dim,), jnp.float32)

    # 1) Primary: (batch, seq, dim) channels-last; lane-dense fold (k=4, L=128).
    x1 = jax.random.normal(kx1, (2, 8, dim), dtype=jnp.float32)
    y1 = jax.block_until_ready(affine(x1, alpha, beta))
    assert y1.shape == x1.shape and y1.dtype == jnp.float32
    assert jnp.allclose(y1, alpha * x1 + beta, atol=1e-6, rtol=1e-6)

    # 2) Row count not divisible by the fold factor -> bulk pallas + jnp tail.
    x2 = jax.random.normal(kx2, (3, 7, dim), dtype=jnp.float32)
    y2 = jax.block_until_ready(affine(x2, alpha, beta))
    assert jnp.allclose(y2, alpha * x2 + beta, atol=1e-6, rtol=1e-6)

    # 3) dim=96 (needs the lcm repack: L=384), bf16 x + f32 params (promotion),
    #    small tile cap so the grid has multiple steps (multi-block / dual-TC path).
    dim3 = 96
    a3 = jnp.ones((dim3,), jnp.float32) + 0.1 * jax.random.normal(ka, (dim3,), jnp.float32)
    b3 = jnp.zeros((dim3,), jnp.float32) + 0.1 * jax.random.normal(kb, (dim3,), jnp.float32)
    x3 = jax.random.normal(kx3, (4, 64, dim3), dtype=jnp.bfloat16)
    y3 = jax.block_until_ready(affine(x3, a3, b3, max_tile_bytes=16 * 1024))
    assert y3.shape == x3.shape and y3.dtype == jnp.float32
    ref3 = a3 * x3.astype(jnp.float32) + b3
    assert jnp.allclose(y3, ref3, atol=1e-5, rtol=1e-5)

    print("KERNEL_OK")
</pallas_src>

<mosaic_0001>
module attributes {stable_mosaic.version = 11 : i64} {
  func.func @_affine_kernel(%arg0: i32, %arg1: memref<1x128xf32, #tpu.memory_space<vmem>>, %arg2: memref<1x128xf32, #tpu.memory_space<vmem>>, %arg3: memref<4x128xf32, #tpu.memory_space<vmem>>, %arg4: memref<4x128xf32, #tpu.memory_space<vmem>>) attributes {dimension_semantics = [#tpu.dimension_semantics<parallel>], iteration_bounds = array<i64: 1>, scalar_prefetch = 0 : i64, scratch_operands = 0 : i64, tpu.core_type = #tpu.core_type<tc>, window_params = [{pipeline_mode = #tpu.pipeline_mode<synchronous>, transform_indices = @transform_0, window_bounds = array<i64: 1, 128>}, {pipeline_mode = #tpu.pipeline_mode<synchronous>, transform_indices = @transform_1, window_bounds = array<i64: 1, 128>}, {transform_indices = @transform_2, window_bounds = array<i64: 4, 128>}, {transform_indices = @transform_3, window_bounds = array<i64: 4, 128>}]} {
    %c0 = arith.constant 0 : index
    %c0_0 = arith.constant 0 : index
    %0 = vector.load %arg1[%c0, %c0_0] : memref<1x128xf32, #tpu.memory_space<vmem>>, vector<1x128xf32>
    %c0_1 = arith.constant 0 : index
    %c0_2 = arith.constant 0 : index
    %1 = vector.load %arg3[%c0_1, %c0_2] : memref<4x128xf32, #tpu.memory_space<vmem>>, vector<4x128xf32>
    %2 = vector.broadcast %0 : vector<1x128xf32> to vector<4x128xf32>
    %3 = arith.mulf %2, %1 : vector<4x128xf32>
    %c0_3 = arith.constant 0 : index
    %c0_4 = arith.constant 0 : index
    %4 = vector.load %arg2[%c0_3, %c0_4] : memref<1x128xf32, #tpu.memory_space<vmem>>, vector<1x128xf32>
    %5 = vector.broadcast %4 : vector<1x128xf32> to vector<4x128xf32>
    %6 = arith.addf %3, %5 : vector<4x128xf32>
    %c0_5 = arith.constant 0 : index
    %c0_6 = arith.constant 0 : index
    %7 = vector.load %arg4[%c0_5, %c0_6] : memref<4x128xf32, #tpu.memory_space<vmem>>, vector<4x128xf32>
    tpu.vector_store %arg4[%c0_5, %c0_6], %6 {strides = array<i32>} : memref<4x128xf32, #tpu.memory_space<vmem>>, vector<4x128xf32>,
    return
  }
  func.func @transform_0(%arg0: i32) -> (i32, i32) {
    %c0_i32 = arith.constant 0 : i32
    %c0_i32_0 = arith.constant 0 : i32
    %c0_i32_1 = arith.constant 0 : i32
    return %c0_i32, %c0_i32_0 : i32, i32
  }
  func.func @transform_1(%arg0: i32) -> (i32, i32) {
    %c0_i32 = arith.constant 0 : i32
    %c0_i32_0 = arith.constant 0 : i32
    %c0_i32_1 = arith.constant 0 : i32
    return %c0_i32, %c0_i32_0 : i32, i32
  }
  func.func @transform_2(%arg0: i32) -> (i32, i32) {
    %c0_i32 = arith.constant 0 : i32
    %c0_i32_0 = arith.constant 0 : i32
    return %arg0, %c0_i32 : i32, i32
  }
  func.func @transform_3(%arg0: i32) -> (i32, i32) {
    %c0_i32 = arith.constant 0 : i32
    %c0_i32_0 = arith.constant 0 : i32
    return %arg0, %c0_i32 : i32, i32
  }
}

</mosaic_0001>

<llo_original>
// kernel: tpu_custom_call.1
$region0: #{tpu_custom_call.1}
  #allocation0 [shape = 'u32[]', space=smem, size = 0x4, offset = 0x4, fixed_abs, tag = 'smem constant byte address 0x4 - core index']
  #allocation1 [shape = 'u32[144,128]{1,0:T(1,128)}', space=vmem, size = 0x12000, scoped, tag = 'internal scratch']
  %s0 = inlined_call_operand.hbm [shape: f32[1,128], index: 0, kind: input, shape index: {}]
  %s1 = inlined_call_operand.vmem [shape: f32[1,128], index: 1, kind: input, shape index: {}]
  %s2 = inlined_call_operand.vmem [shape: f32[4,128], index: 2, kind: input, shape index: {}]
  %s3 = inlined_call_operand.hbm [shape: f32[4,128], index: 3, kind: output, shape index: {}]
  %s4 = sld [smem:[#allocation0]]
  $region26: #{tpu_custom_call.1} parent=0
    _
  %s6 = ssub.s32 1, %s4
  %s7 = scalar_select 0, %s6, %s4
  $region1: #{tpu_custom_call.1} parent=0
    #allocation2 [shape = 'u8[512]{0}', space=vmem, size = 0x400, scoped, tag = 'input window, operand 0, single buffered']
    #allocation3 [shape = 's32[1]{0}', space=sflag, size = 0x4, scoped, tag = 'scoped memory for tpu_custom_call.1']
    #allocation4 [shape = 's32[1]{0}', space=sflag, size = 0x4, scoped, tag = 'scoped memory for tpu_custom_call.1']
    #allocation5 [shape = 'u8[2048]{0}', space=vmem, size = 0x800, scoped, tag = 'output window, operand 0, single buffered']
    %8 = vsyncpa [#allocation3], 0
    %9 = vsyncpa [#allocation4], 0
    // Predicated region
    $region2: #{tpu_custom_call.1} parent=1 // pred_check
      _
    $region3: #{tpu_custom_call.1} parent=1 // pred_check_branch
      %11 = sbr.rel (0) target = $region5
    $region4: #{tpu_custom_call.1} parent=1 // pred_region
      %s13 = ssub.s32 16, 16
      %14 = vsyncadd [#allocation3], %s13
      %s16 = sshll.u32 [#allocation2], 4
      %s17 = int_to_ptr.vmem [resolvable:$true] %s16
      %19 = dma.hbm_to_vmem [thread:$0]  %s0, 16, %s17, [#allocation3]
    $region5: #{tpu_custom_call.1} parent=1 // pred_fallthru
      _
    // Predicated region
    $region6: #{tpu_custom_call.1} parent=1 // pred_check
      _
    $region7: #{tpu_custom_call.1} parent=1 // pred_check_branch
      %21 = sbr.rel (0) target = $region9
    $region8: #{tpu_custom_call.1} parent=1 // pred_region
      _
    $region9: #{tpu_custom_call.1} parent=1 // pred_fallthru
      _
    // Predicated region
    $region10: #{tpu_custom_call.1} parent=1 // pred_check
      _
    $region11: #{tpu_custom_call.1} parent=1 // pred_check_branch
      %23 = sbr.rel (0) target = $region13
    $region12: #{tpu_custom_call.1} parent=1 // pred_region
      _
    $region13: #{tpu_custom_call.1} parent=1 // pred_fallthru
      _
    // Predicated region
    $region14: #{tpu_custom_call.1} parent=1 // pred_check
      _
    $region15: #{tpu_custom_call.1} parent=1 // pred_check_branch
      %25 = sbr.rel (0) target = $region17
    $region16: #{tpu_custom_call.1} parent=1 // pred_region
      %26 = dma.done [#allocation3], 16
    $region17: #{tpu_custom_call.1} parent=1 // pred_fallthru
      _
    %v27 = vld [vmem:[#allocation2] sm:$0x1]
    %v28 = vld [vmem:[%s2] sm:$0xf]
    %v30 = vlaneseq
    %v31 = vshrl.u32 %v30, 7
    %v32 = vsub.s32 0, %v31
    %v33 = vrot.slane %v27, %v32
    %v35 = vmul.f32 %v33, %v28
    %v36 = vld [vmem:[%s1] sm:$0x1]
    %v38 = vlaneseq
    %v39 = vshrl.u32 %v38, 7
    %v40 = vsub.s32 0, %v39
    %v41 = vrot.slane %v36, %v40
    %v43 = vadd.f32 %v35, %v41
    %44 = vst [vmem:[#allocation5] sm:$0xf] %v43
    // Predicated region
    $region18: #{tpu_custom_call.1} parent=1 // pred_check
      _
    $region19: #{tpu_custom_call.1} parent=1 // pred_check_branch
      %46 = sbr.rel (0) target = $region21
    $region20: #{tpu_custom_call.1} parent=1 // pred_region
      %s48 = ssub.s32 64, 64
      %49 = vsyncadd [#allocation4], %s48
      %s51 = sshll.u32 [#allocation5], 4
      %s52 = int_to_ptr.vmem [resolvable:$true] %s51
      %54 = dma.vmem_to_hbm [thread:$0]  %s52, 64, %s3, [#allocation4]
    $region21: #{tpu_custom_call.1} parent=1 // pred_fallthru
      _
    // Predicated region
    $region22: #{tpu_custom_call.1} parent=1 // pred_check
      _
    $region23: #{tpu_custom_call.1} parent=1 // pred_check_branch
      %56 = sbr.rel (0) target = $region25
    $region24: #{tpu_custom_call.1} parent=1 // pred_region
      %57 = dma.done [#allocation4], 64
    $region25: #{tpu_custom_call.1} parent=1 // pred_fallthru
      _
    %58 = vsyncpa [#allocation3], 1
    %59 = vsyncpa [#allocation4], 1

</llo_original>
